<compile_context>
chip_gen: v7x
topology: tpu7x:2x2x1
jax: 0.10.0
libtpu: 0.0.40
codegen_flags: <defaults>
</compile_context>

<pallas_src>
import functools

import jax
import jax.numpy as jnp
from jax.experimental import pallas as pl
from jax.experimental.pallas import tpu as pltpu


# ----------------------------------------------------------------------------
# Pallas kernels
# ----------------------------------------------------------------------------
def _conv_stats_kernel(p_ref, w_ref, out_ref, psum_ref, psq_ref):
    """One column tile of the transposed im2col matmul + per-tile channel stats.

    p_ref:   (K, TILE_M)    bf16  streamed patch tile (lane-dense)
    w_ref:   (COUT, K)      bf16  resident weight
    out_ref: (COUT, TILE_M) bf16  conv output tile (lane-dense bf16 intermediate)
    psum_ref/psq_ref: (1, 1, COUT) f32 per-tile partial sum / sum-of-squares
    (taken from the f32 accumulator before the bf16 downcast -> exact stats).
    """
    acc = jnp.dot(w_ref[...], p_ref[...], preferred_element_type=jnp.float32)
    out_ref[...] = acc.astype(out_ref.dtype)
    cout = acc.shape[0]
    # Per-tile partial statistics (reduced across tiles in plain JAX), so the
    # grid axis stays "parallel" (megacore-safe on v7x).
    psum_ref[...] = jnp.sum(acc, axis=1).reshape(1, 1, cout)
    psq_ref[...] = jnp.sum(acc * acc, axis=1).reshape(1, 1, cout)


def _bn_relu_kernel(x_ref, scale_ref, shift_ref, o_ref):
    """Fused BatchNorm (pre-folded per-channel scale/shift) + ReLU.

    x_ref: (COUT, TS) bf16; scale/shift: (COUT, 1) f32; o_ref: (1, COUT, TS) f32
    (the output block is already in final NCHW layout)."""
    x = x_ref[...].astype(jnp.float32)
    y = x * scale_ref[...] + shift_ref[...]
    o_ref[...] = jnp.maximum(y, 0.0)[None, :, :]


# ----------------------------------------------------------------------------
# Plain-JAX glue
# ----------------------------------------------------------------------------
def _round_up(x, m):
    return ((x + m - 1) // m) * m


def _largest_divisor_tile(total, cap):
    """Largest multiple of 128 dividing `total` and <= cap (total % 128 == 0)."""
    cap = max(128, (cap // 128) * 128)
    best, t = 128, 128
    while t <= min(total, cap):
        if total % t == 0:
            best = t
        t += 128
    return best


def _vmem_budget_bytes():
    """Generation-aware VMEM ceiling (v5e/v6e: 128 MiB phys; v7x-class: 64 MiB)."""
    phys = 128 * 1024 * 1024
    try:
        info = pltpu.get_tpu_info()
        phys = int(getattr(info, "vmem_capacity_bytes", phys)) or phys
    except Exception:
        pass
    if phys >= 100 * 1024 * 1024:
        return 96 * 1024 * 1024      # v5e / v6e
    return 36 * 1024 * 1024          # 64-MiB-class (v7x per-TC)


def _im2col_t(x_t_bf, kh, kw, stride, padding, oh, ow, ohw_pad):
    """Transposed patch matrix (K, N*OHW_pad) from a (Cin, N, H, W) bf16 input.

    K ordering is (kh, kw, cin).  The per-image spatial axis is zero-padded to
    `ohw_pad` (multiple of the BN tile): padded columns produce conv output 0
    and contribute nothing to the BatchNorm statistics."""
    c, n, _, _ = x_t_bf.shape
    xp = jnp.pad(x_t_bf, ((0, 0), (0, 0), (padding, padding), (padding, padding)))
    taps = []
    for i in range(kh):
        for j in range(kw):
            taps.append(xp[:, :, i:i + stride * oh:stride, j:j + stride * ow:stride])
    p = jnp.stack(taps, axis=0)                    # (KH*KW, Cin, N, OH, OW)
    p = p.reshape(kh * kw * c, n, oh * ow)
    if ohw_pad > oh * ow:
        p = jnp.pad(p, ((0, 0), (0, 0), (0, ohw_pad - oh * ow)))
    return p.reshape(kh * kw * c, n * ohw_pad)


@functools.partial(jax.jit,
                   static_argnames=("stride", "padding", "tile_m_cap", "ts_cap", "eps"))
def basic_conv_forward(x_nchw, weight, bias, gamma, beta,
                       *, stride=1, padding=1, tile_m_cap=4096, ts_cap=4096,
                       eps=1e-5):
    """Forward pass of basic_conv (conv -> BN(train batch stats) -> ReLU)."""
    n, cin, h, w = x_nchw.shape
    cout, _, kh, kw = weight.shape

    # Conv bias followed by train-mode BatchNorm cancels exactly; never enters
    # the kernel.  (Must be re-added if running-stats / eval mode is ever used.)
    del bias

    oh = (h + 2 * padding - kh) // stride + 1
    ow = (w + 2 * padding - kw) // stride + 1
    ohw = oh * ow
    k = kh * kw * cin

    budget = _vmem_budget_bytes()
    usable = int(0.6 * budget)

    # ---- BN spatial tile and per-image padded spatial extent -----------------
    ts_by_vmem = usable // (12 * cout)                      # 2x(bf16 in) + 2x(f32 out)
    ts = min(ts_cap, max(128, ts_by_vmem), _round_up(ohw, 128))
    ts = max(128, (ts // 128) * 128)
    ohw_pad = _round_up(ohw, ts)
    s_tiles = ohw_pad // ts
    m_pad = n * ohw_pad

    # ---- conv column tile, clamped by the VMEM budget ------------------------
    tm_by_vmem = max(128, (usable - 4 * cout * k) // (4 * k + 8 * cout))
    tile_m = _largest_divisor_tile(m_pad, min(tile_m_cap, tm_by_vmem))
    num_tiles = m_pad // tile_m

    # ---- bf16, transpose-free patch construction (1x-sized input reshuffle) --
    x_t_bf = jnp.transpose(x_nchw.astype(jnp.bfloat16), (1, 0, 2, 3))  # (Cin,N,H,W)
    patches_t = _im2col_t(x_t_bf, kh, kw, stride, padding, oh, ow, ohw_pad)  # (K, M_pad)
    w_bf = jnp.transpose(weight, (0, 2, 3, 1)).reshape(cout, k).astype(jnp.bfloat16)

    # ---- per-kernel VMEM limits (leave headroom, never exceed the budget) ----
    est_conv = tile_m * (4 * k + 8 * cout) + 4 * cout * k + 64 * 1024
    limit_conv = int(min(budget, max(16 * 1024 * 1024, 4 * est_conv)))
    est_bn = 12 * cout * ts + 8 * cout + 64 * 1024
    limit_bn = int(min(budget, max(16 * 1024 * 1024, 4 * est_bn)))

    conv_flops = 2 * cout * k * m_pad
    conv_bytes = (k * m_pad * 2 + cout * k * 2 + cout * m_pad * 2
                  + 2 * num_tiles * cout * 4)

    conv_t, psum, psq = pl.pallas_call(
        _conv_stats_kernel,
        out_shape=(
            jax.ShapeDtypeStruct((cout, m_pad), jnp.bfloat16),
            jax.ShapeDtypeStruct((num_tiles, 1, cout), jnp.float32),
            jax.ShapeDtypeStruct((num_tiles, 1, cout), jnp.float32),
        ),
        grid_spec=pltpu.PrefetchScalarGridSpec(
            num_scalar_prefetch=0,
            grid=(num_tiles,),
            in_specs=[
                pl.BlockSpec((k, tile_m), lambda i: (0, i)),      # streamed patches
                pl.BlockSpec((cout, k), lambda i: (0, 0)),        # resident weight
            ],
            out_specs=(
                pl.BlockSpec((cout, tile_m), lambda i: (0, i)),   # lane-dense out
                pl.BlockSpec((1, 1, cout), lambda i: (i, 0, 0)),  # per-tile stats
                pl.BlockSpec((1, 1, cout), lambda i: (i, 0, 0)),
            ),
        ),
        compiler_params=pltpu.CompilerParams(
            dimension_semantics=("parallel",),
            vmem_limit_bytes=limit_conv),
        cost_estimate=pl.CostEstimate(flops=int(conv_flops), transcendentals=0,
                                      bytes_accessed=int(conv_bytes)),
    )(patches_t, w_bf)

    # BatchNorm training-mode statistics over (N, OH, OW) per channel, biased
    # variance, eps=1e-5 (fresh nn.BatchNorm2d in train()).  Stats come from the
    # f32 accumulator; padded columns contribute 0, so divide by the true count.
    m_true = float(n * ohw)
    ch_sum = jnp.sum(psum[:, 0, :], axis=0)
    ch_sq = jnp.sum(psq[:, 0, :], axis=0)
    mean = ch_sum / m_true
    var = jnp.maximum(ch_sq / m_true - mean * mean, 0.0)   # cancellation guard
    inv = gamma * jax.lax.rsqrt(var + eps)
    scale = inv.astype(jnp.float32).reshape(cout, 1)
    shift = (beta - mean * inv).astype(jnp.float32).reshape(cout, 1)

    bn_bytes = cout * m_pad * 2 + n * cout * ohw_pad * 4 + 2 * cout * 4

    y = pl.pallas_call(
        _bn_relu_kernel,
        out_shape=jax.ShapeDtypeStruct((n, cout, ohw_pad), jnp.float32),
        grid_spec=pltpu.PrefetchScalarGridSpec(
            num_scalar_prefetch=0,
            grid=(n, s_tiles),
            in_specs=[
                pl.BlockSpec((cout, ts), lambda b, s: (0, b * s_tiles + s)),
                pl.BlockSpec((cout, 1), lambda b, s: (0, 0)),
                pl.BlockSpec((cout, 1), lambda b, s: (0, 0)),
            ],
            out_specs=pl.BlockSpec((1, cout, ts), lambda b, s: (b, 0, s)),
        ),
        compiler_params=pltpu.CompilerParams(
            dimension_semantics=("parallel", "parallel"),
            vmem_limit_bytes=limit_bn),
        cost_estimate=pl.CostEstimate(flops=int(2 * n * cout * ohw_pad),
                                      transcendentals=0,
                                      bytes_accessed=int(bn_bytes)),
    )(conv_t, scale, shift)

    # Drop the per-image spatial padding (no-op when ohw is already a multiple
    # of ts) and reshape (free) to NCHW.
    y = y[:, :, :ohw]
    return y.reshape(n, cout, oh, ow)


# ----------------------------------------------------------------------------
# Pure-JAX reference (includes the conv bias, to validate its BN cancellation)
# ----------------------------------------------------------------------------
def _reference(x_nchw, weight, bias, gamma, beta, *, stride=1, padding=1, eps=1e-5):
    conv = jax.lax.conv_general_dilated(
        x_nchw.astype(jnp.float32), weight.astype(jnp.float32),
        window_strides=(stride, stride),
        padding=((padding, padding), (padding, padding)),
        dimension_numbers=("NCHW", "OIHW", "NCHW"))
    conv = conv + bias.reshape(1, -1, 1, 1)
    mean = jnp.mean(conv, axis=(0, 2, 3), keepdims=True)
    var = jnp.mean((conv - mean) ** 2, axis=(0, 2, 3), keepdims=True)
    y = (conv - mean) * jax.lax.rsqrt(var + eps)
    y = y * gamma.reshape(1, -1, 1, 1) + beta.reshape(1, -1, 1, 1)
    return jnp.maximum(y, 0.0)


if __name__ == "__main__":
    # basic_conv(in_planes=4, out_planes=8, kernel_size=3, stride=1, padding=1)
    N, CIN, H, W = 2, 4, 16, 16
    COUT, KH, KW = 8, 3, 3

    key = jax.random.PRNGKey(0)
    kx, kw_, kb, kg, kbeta = jax.random.split(key, 5)

    x = jax.random.normal(kx, (N, CIN, H, W), dtype=jnp.float32)
    weight = 0.1 * jax.random.normal(kw_, (COUT, CIN, KH, KW), dtype=jnp.float32)
    bias = 0.05 * jax.random.normal(kb, (COUT,), dtype=jnp.float32)
    gamma = 1.0 + 0.1 * jax.random.normal(kg, (COUT,), dtype=jnp.float32)
    beta = 0.1 * jax.random.normal(kbeta, (COUT,), dtype=jnp.float32)

    # Small caps so the demo (M_pad = 512, OHW = 256) exercises multi-tile
    # partial statistics and multi-tile BN; for real layers leave the defaults
    # (4096) and let the generation-aware VMEM budget clamp them.
    out = basic_conv_forward(x, weight, bias, gamma, beta,
                             stride=1, padding=1, tile_m_cap=256, ts_cap=128)
    out = jax.block_until_ready(out)

    # The kernel uses bf16 MXU operands and a bf16 conv intermediate, so compare
    # against an f32 reference run on bf16-rounded inputs with a tolerance that
    # reflects bf16 rounding of the O(1) normalized activations (~1e-2).
    xq = x.astype(jnp.bfloat16).astype(jnp.float32)
    wq = weight.astype(jnp.bfloat16).astype(jnp.float32)
    ref = _reference(xq, wq, bias, gamma, beta, stride=1, padding=1)

    assert out.shape == (N, COUT, H, W), out.shape
    max_err = float(jnp.max(jnp.abs(out - ref)))
    assert jnp.allclose(out, ref, rtol=2e-2, atol=2e-2), max_err

    print("KERNEL_OK")
</pallas_src>

<mosaic_0001>
module attributes {stable_mosaic.version = 11 : i64} {
  func.func @_conv_stats_kernel(%arg0: i32, %arg1: memref<36x256xbf16, #tpu.memory_space<vmem>>, %arg2: memref<8x36xbf16, #tpu.memory_space<vmem>>, %arg3: memref<8x256xbf16, #tpu.memory_space<vmem>>, %arg4: memref<1x1x8xf32, #tpu.memory_space<vmem>>, %arg5: memref<1x1x8xf32, #tpu.memory_space<vmem>>) attributes {dimension_semantics = [#tpu.dimension_semantics<parallel>], iteration_bounds = array<i64: 2>, scalar_prefetch = 0 : i64, scratch_operands = 0 : i64, tpu.core_type = #tpu.core_type<tc>, window_params = [{transform_indices = @transform_0, window_bounds = array<i64: 36, 256>}, {pipeline_mode = #tpu.pipeline_mode<synchronous>, transform_indices = @transform_1, window_bounds = array<i64: 8, 36>}, {transform_indices = @transform_2, window_bounds = array<i64: 8, 256>}, {transform_indices = @transform_3, window_bounds = array<i64: 1, 1, 8>}, {transform_indices = @transform_4, window_bounds = array<i64: 1, 1, 8>}]} {
    %c0 = arith.constant 0 : index
    %c0_0 = arith.constant 0 : index
    %0 = vector.load %arg2[%c0, %c0_0] : memref<8x36xbf16, #tpu.memory_space<vmem>>, vector<8x36xbf16>
    %c0_1 = arith.constant 0 : index
    %c0_2 = arith.constant 0 : index
    %1 = vector.load %arg1[%c0_1, %c0_2] : memref<36x256xbf16, #tpu.memory_space<vmem>>, vector<36x256xbf16>
    %cst = arith.constant dense<0.000000e+00> : vector<8x256xf32>
    %2 = tpu.matmul %0, %1, %cst {dimension_numbers = #tpu.dot_dimension_numbers<[1], [0], [0], [1], [0, 0, 1, 1], [], []>} : vector<8x36xbf16>, vector<36x256xbf16>, vector<8x256xf32> -> vector<8x256xf32>
    %3 = arith.truncf %2 : vector<8x256xf32> to vector<8x256xbf16>
    %c0_3 = arith.constant 0 : index
    %c0_4 = arith.constant 0 : index
    %4 = vector.load %arg3[%c0_3, %c0_4] : memref<8x256xbf16, #tpu.memory_space<vmem>>, vector<8x256xbf16>
    tpu.vector_store %arg3[%c0_3, %c0_4], %3 {strides = array<i32>} : memref<8x256xbf16, #tpu.memory_space<vmem>>, vector<8x256xbf16>,
    %cst_5 = arith.constant dense<0.000000e+00> : vector<8xf32>
    %5 = vector.multi_reduction <add>, %2, %cst_5 [1] : vector<8x256xf32> to vector<8xf32>
    %6 = vector.shape_cast %5 : vector<8xf32> to vector<1x1x8xf32>
    %c0_6 = arith.constant 0 : index
    %c0_7 = arith.constant 0 : index
    %c0_8 = arith.constant 0 : index
    %7 = vector.load %arg4[%c0_6, %c0_7, %c0_8] : memref<1x1x8xf32, #tpu.memory_space<vmem>>, vector<1x1x8xf32>
    tpu.vector_store %arg4[%c0_6, %c0_7, %c0_8], %6 {strides = array<i32>} : memref<1x1x8xf32, #tpu.memory_space<vmem>>, vector<1x1x8xf32>,
    %8 = arith.mulf %2, %2 : vector<8x256xf32>
    %cst_9 = arith.constant dense<0.000000e+00> : vector<8xf32>
    %9 = vector.multi_reduction <add>, %8, %cst_9 [1] : vector<8x256xf32> to vector<8xf32>
    %10 = vector.shape_cast %9 : vector<8xf32> to vector<1x1x8xf32>
    %c0_10 = arith.constant 0 : index
    %c0_11 = arith.constant 0 : index
    %c0_12 = arith.constant 0 : index
    %11 = vector.load %arg5[%c0_10, %c0_11, %c0_12] : memref<1x1x8xf32, #tpu.memory_space<vmem>>, vector<1x1x8xf32>
    tpu.vector_store %arg5[%c0_10, %c0_11, %c0_12], %10 {strides = array<i32>} : memref<1x1x8xf32, #tpu.memory_space<vmem>>, vector<1x1x8xf32>,
    return
  }
  func.func @transform_0(%arg0: i32) -> (i32, i32) {
    %c0_i32 = arith.constant 0 : i32
    %c0_i32_0 = arith.constant 0 : i32
    return %c0_i32, %arg0 : i32, i32
  }
  func.func @transform_1(%arg0: i32) -> (i32, i32) {
    %c0_i32 = arith.constant 0 : i32
    %c0_i32_0 = arith.constant 0 : i32
    %c0_i32_1 = arith.constant 0 : i32
    return %c0_i32, %c0_i32_0 : i32, i32
  }
  func.func @transform_2(%arg0: i32) -> (i32, i32) {
    %c0_i32 = arith.constant 0 : i32
    %c0_i32_0 = arith.constant 0 : i32
    return %c0_i32, %arg0 : i32, i32
  }
  func.func @transform_3(%arg0: i32) -> (i32, i32, i32) {
    %c0_i32 = arith.constant 0 : i32
    %c0_i32_0 = arith.constant 0 : i32
    %c0_i32_1 = arith.constant 0 : i32
    return %arg0, %c0_i32, %c0_i32_0 : i32, i32, i32
  }
  func.func @transform_4(%arg0: i32) -> (i32, i32, i32) {
    %c0_i32 = arith.constant 0 : i32
    %c0_i32_0 = arith.constant 0 : i32
    %c0_i32_1 = arith.constant 0 : i32
    return %arg0, %c0_i32, %c0_i32_0 : i32, i32, i32
  }
}

module attributes {stable_mosaic.version = 11 : i64} {
  func.func @_bn_relu_kernel(%arg0: i32, %arg1: i32, %arg2: memref<8x128xbf16, #tpu.memory_space<vmem>>, %arg3: memref<8x1xf32, #tpu.memory_space<vmem>>, %arg4: memref<8x1xf32, #tpu.memory_space<vmem>>, %arg5: memref<1x8x128xf32, #tpu.memory_space<vmem>>) attributes {dimension_semantics = [#tpu.dimension_semantics<parallel>, #tpu.dimension_semantics<parallel>], iteration_bounds = array<i64: 2, 2>, scalar_prefetch = 0 : i64, scratch_operands = 0 : i64, tpu.core_type = #tpu.core_type<tc>, window_params = [{transform_indices = @transform_0, window_bounds = array<i64: 8, 128>}, {pipeline_mode = #tpu.pipeline_mode<synchronous>, transform_indices = @transform_1, window_bounds = array<i64: 8, 1>}, {pipeline_mode = #tpu.pipeline_mode<synchronous>, transform_indices = @transform_2, window_bounds = array<i64: 8, 1>}, {transform_indices = @transform_3, window_bounds = array<i64: 1, 8, 128>}]} {
    %c0 = arith.constant 0 : index
    %c0_0 = arith.constant 0 : index
    %0 = vector.load %arg2[%c0, %c0_0] : memref<8x128xbf16, #tpu.memory_space<vmem>>, vector<8x128xbf16>
    %1 = arith.extf %0 : vector<8x128xbf16> to vector<8x128xf32>
    %c0_1 = arith.constant 0 : index
    %c0_2 = arith.constant 0 : index
    %2 = vector.load %arg3[%c0_1, %c0_2] : memref<8x1xf32, #tpu.memory_space<vmem>>, vector<8x1xf32>
    %3 = vector.broadcast %2 : vector<8x1xf32> to vector<8x128xf32>
    %4 = arith.mulf %1, %3 : vector<8x128xf32>
    %c0_3 = arith.constant 0 : index
    %c0_4 = arith.constant 0 : index
    %5 = vector.load %arg4[%c0_3, %c0_4] : memref<8x1xf32, #tpu.memory_space<vmem>>, vector<8x1xf32>
    %6 = vector.broadcast %5 : vector<8x1xf32> to vector<8x128xf32>
    %7 = arith.addf %4, %6 : vector<8x128xf32>
    %cst = arith.constant 0.000000e+00 : f32
    %8 = vector.broadcast %cst : f32 to vector<8x128xf32>
    %9 = arith.maximumf %7, %8 : vector<8x128xf32>
    %10 = vector.shape_cast %9 : vector<8x128xf32> to vector<1x8x128xf32>
    %c0_5 = arith.constant 0 : index
    %c0_6 = arith.constant 0 : index
    %c0_7 = arith.constant 0 : index
    %11 = vector.load %arg5[%c0_5, %c0_6, %c0_7] : memref<1x8x128xf32, #tpu.memory_space<vmem>>, vector<1x8x128xf32>
    tpu.vector_store %arg5[%c0_5, %c0_6, %c0_7], %10 {strides = array<i32>} : memref<1x8x128xf32, #tpu.memory_space<vmem>>, vector<1x8x128xf32>,
    return
  }
  func.func @transform_0(%arg0: i32, %arg1: i32) -> (i32, i32) {
    %c2_i32 = arith.constant 2 : i32
    %0 = arith.muli %arg0, %c2_i32 : i32
    %1 = arith.addi %0, %arg1 : i32
    %c0_i32 = arith.constant 0 : i32
    %c0_i32_0 = arith.constant 0 : i32
    return %c0_i32, %1 : i32, i32
  }
  func.func @transform_1(%arg0: i32, %arg1: i32) -> (i32, i32) {
    %c0_i32 = arith.constant 0 : i32
    %c0_i32_0 = arith.constant 0 : i32
    %c0_i32_1 = arith.constant 0 : i32
    return %c0_i32, %c0_i32_0 : i32, i32
  }
  func.func @transform_2(%arg0: i32, %arg1: i32) -> (i32, i32) {
    %c0_i32 = arith.constant 0 : i32
    %c0_i32_0 = arith.constant 0 : i32
    %c0_i32_1 = arith.constant 0 : i32
    return %c0_i32, %c0_i32_0 : i32, i32
  }
  func.func @transform_3(%arg0: i32, %arg1: i32) -> (i32, i32, i32) {
    %c0_i32 = arith.constant 0 : i32
    %c0_i32_0 = arith.constant 0 : i32
    return %arg0, %c0_i32, %arg1 : i32, i32, i32
  }
}

</mosaic_0001>

<llo_original>
// kernel: basic_conv_forward.2
$region0: #{basic_conv_forward.2}
  #allocation0 [shape = 'u32[]', space=smem, size = 0x4, offset = 0x4, fixed_abs, tag = 'smem constant byte address 0x4 - core index']
  #allocation1 [shape = 'u32[144,128]{1,0:T(1,128)}', space=vmem, size = 0x12000, scoped, tag = 'internal scratch']
  %s0 = inlined_call_operand.vmem [shape: bf16[36,512], index: 0, kind: input, shape index: {}]
  %s1 = inlined_call_operand.vmem [shape: bf16[8,36], index: 1, kind: input, shape index: {}]
  %s2 = inlined_call_operand.vmem [shape: bf16[8,512], index: 2, kind: output, shape index: {0}]
  %s3 = inlined_call_operand.vmem [shape: f32[2,1,8], index: 3, kind: output, shape index: {1}]
  %s4 = inlined_call_operand.vmem [shape: f32[2,1,8], index: 4, kind: output, shape index: {2}]
  %5 = xla_tuple %s2, %s3, %s4
  %s6 = sld [smem:[#allocation0]]
  $region95: #{basic_conv_forward.2} parent=0
    _
  %s8 = ssub.s32 1, %s6
  %s9 = scalar_select 0, %s8, %s6
  $region1: #{basic_conv_forward.2} parent=0
    #allocation2 [shape = 'u8[40960]{0}', space=vmem, size = 0xa000, scoped, tag = 'input window, operand 0']
    loop: start=0, step=1, limit=4
    $region2: #{basic_conv_forward.2} parent=1 // loop_pre_header
      _
    $region3: #{basic_conv_forward.2} parent=1 // loop_header
      %s11 = sphi 0, %s15
      %p12 = scmp.ge.s32.totalorder %s11, 4
      %s21 = sphi 0, %s23
      %s24 = sphi 0, %s21
      %s25 = sphi 0, %s24
      %s41 = sphi 0, %s25
      %s45 = sphi 0, %s45
      %s47 = sphi 0, %s45
      %s48 = sphi 0, %s47
      %s62 = sphi 0, %s48
      %s68 = sphi 0, %s70
      %s71 = sphi 0, %s68
      %s72 = sphi 0, %s71
      %s88 = sphi 0, %s72
      %s94 = sphi 0, %s96
      %s97 = sphi 0, %s94
      %s98 = sphi 0, %s97
      %s114 = sphi 0, %s98
      %s120 = sphi 0, %s122
      %s123 = sphi 0, %s120
      %s124 = sphi 0, %s123
      %s140 = sphi 0, %s124
    $region4: #{basic_conv_forward.2} parent=1 // loop_header_branch
      %14 = sbr.rel (%p12) target = $region8
    $region5: #{basic_conv_forward.2} parent=1 // loop_body
      %s16 = ssub.s32 %s11, 1
      %s17 = ssub.s32 %s11, 2
      %s18 = sadd.s32 %s11, 1
      %s19 = ssub.s32 %s11, %s18
      %p20 = scmp.eq.s32.totalorder %s19, 0
      %s22 = sadd.s32 %s21, 1
      %s23 = scalar_select %p20, %s21, %s22
      %p26 = pneg %p20
      %p27 = scmp.eq.s32.totalorder %s11, 1
      %p28 = por %p26, %p27
      %p29 = scmp.ne.s32.totalorder %s21, %s24
      %p30 = scmp.eq.s32.totalorder %s11, 0
      %p31 = por %p29, %p30
      %p32 = scmp.ne.s32.totalorder %s21, %s24
      %p33 = scmp.eq.s32.totalorder %s16, 1
      %p34 = por %p32, %p33
      %p35 = scmp.ne.s32.totalorder %s24, %s25
      %p36 = scmp.eq.s32.totalorder %s16, 0
      %p37 = por %p35, %p36
      %p38 = scmp.ne.s32.totalorder %s24, %s25
      %p39 = scmp.eq.s32.totalorder %s17, 1
      %p40 = por %p38, %p39
      %p42 = scmp.ne.s32.totalorder %s25, %s41
      %p43 = scmp.eq.s32.totalorder %s17, 0
      %p44 = por %p42, %p43
      %s46 = sadd.s32 %s45, 1
      %p49 = scmp.eq.s32.totalorder %s11, 1
      %p50 = scmp.ne.s32.totalorder %s45, %s47
      %p51 = scmp.eq.s32.totalorder %s11, 0
      %p52 = por %p50, %p51
      %p53 = scmp.ne.s32.totalorder %s45, %s47
      %p54 = scmp.eq.s32.totalorder %s16, 1
      %p55 = por %p53, %p54
      %p56 = scmp.ne.s32.totalorder %s47, %s48
      %p57 = scmp.eq.s32.totalorder %s16, 0
      %p58 = por %p56, %p57
      %p59 = scmp.ne.s32.totalorder %s47, %s48
      %p60 = scmp.eq.s32.totalorder %s17, 1
      %p61 = por %p59, %p60
      %p63 = scmp.ne.s32.totalorder %s48, %s62
      %p64 = scmp.eq.s32.totalorder %s17, 0
      %p65 = por %p63, %p64
      %s66 = ssub.s32 %s11, %s18
      %p67 = scmp.eq.s32.totalorder %s66, 0
      %s69 = sadd.s32 %s68, 1
      %s70 = scalar_select %p67, %s68, %s69
      %p73 = pneg %p67
      %p74 = scmp.eq.s32.totalorder %s11, 1
      %p75 = por %p73, %p74
      %p76 = scmp.ne.s32.totalorder %s68, %s71
      %p77 = scmp.eq.s32.totalorder %s11, 0
      %p78 = por %p76, %p77
      %p79 = scmp.ne.s32.totalorder %s68, %s71
      %p80 = scmp.eq.s32.totalorder %s16, 1
      %p81 = por %p79, %p80
      %p82 = scmp.ne.s32.totalorder %s71, %s72
      %p83 = scmp.eq.s32.totalorder %s16, 0
      %p84 = por %p82, %p83
      %p85 = scmp.ne.s32.totalorder %s71, %s72
      %p86 = scmp.eq.s32.totalorder %s17, 1
      %p87 = por %p85, %p86
      %p89 = scmp.ne.s32.totalorder %s72, %s88
      %p90 = scmp.eq.s32.totalorder %s17, 0
      %p91 = por %p89, %p90
      %s92 = ssub.s32 %s11, %s18
      %p93 = scmp.eq.s32.totalorder %s92, 0
      %s95 = sadd.s32 %s94, 1
      %s96 = scalar_select %p93, %s94, %s95
      %p99 = pneg %p93
      %p100 = scmp.eq.s32.totalorder %s11, 1
      %p101 = por %p99, %p100
      %p102 = scmp.ne.s32.totalorder %s94, %s97
      %p103 = scmp.eq.s32.totalorder %s11, 0
      %p104 = por %p102, %p103
      %p105 = scmp.ne.s32.totalorder %s94, %s97
      %p106 = scmp.eq.s32.totalorder %s16, 1
      %p107 = por %p105, %p106
      %p108 = scmp.ne.s32.totalorder %s97, %s98
      %p109 = scmp.eq.s32.totalorder %s16, 0
      %p110 = por %p108, %p109
      %p111 = scmp.ne.s32.totalorder %s97, %s98
      %p112 = scmp.eq.s32.totalorder %s17, 1
      %p113 = por %p111, %p112
      %p115 = scmp.ne.s32.totalorder %s98, %s114
      %p116 = scmp.eq.s32.totalorder %s17, 0
      %p117 = por %p115, %p116
      %s118 = ssub.s32 %s11, %s18
      %p119 = scmp.eq.s32.totalorder %s118, 0
      %s121 = sadd.s32 %s120, 1
      %s122 = scalar_select %p119, %s120, %s121
      %p125 = pneg %p119
      %p126 = scmp.eq.s32.totalorder %s11, 1
      %p127 = por %p125, %p126
      %p128 = scmp.ne.s32.totalorder %s120, %s123
      %p129 = scmp.eq.s32.totalorder %s11, 0
      %p130 = por %p128, %p129
      %p131 = scmp.ne.s32.totalorder %s120, %s123
      %p132 = scmp.eq.s32.totalorder %s16, 1
      %p133 = por %p131, %p132
      %p134 = scmp.ne.s32.totalorder %s123, %s124
      %p135 = scmp.eq.s32.totalorder %s16, 0
      %p136 = por %p134, %p135
      %p137 = scmp.ne.s32.totalorder %s123, %s124
      %p138 = scmp.eq.s32.totalorder %s17, 1
      %p139 = por %p137, %p138
      %p141 = scmp.ne.s32.totalorder %s124, %s140
      %p142 = scmp.eq.s32.totalorder %s17, 0
      %p143 = por %p141, %p142
      %p144 = scmp.le.s32.totalorder 1, %s11
      %p145 = scmp.lt.s32.totalorder %s11, 3
      %p146 = pnand %p144, %p145
      %p147 = pneg %p146
      // Predicated region
      $region9: #{basic_conv_forward.2} parent=5 // pred_check
        _
      $region10: #{basic_conv_forward.2} parent=5 // pred_check_branch
        %149 = sbr.rel (%p146) target = $region12
      $region11: #{basic_conv_forward.2} parent=5 // pred_region
        %s150 = ssub.s32 %s11, 1
        // Predicated region
        $region13: #{basic_conv_forward.2} parent=11 // pred_check
          %p151 = pneg %p58
        $region14: #{basic_conv_forward.2} parent=11 // pred_check_branch
          %153 = sbr.rel (%p151) target = $region16
        $region15: #{basic_conv_forward.2} parent=11 // pred_region
          _
        $region16: #{basic_conv_forward.2} parent=11 // pred_fallthru
          _
      $region12: #{basic_conv_forward.2} parent=5 // pred_fallthru
        _
      %p154 = scmp.lt.s32.totalorder %s11, 2
      // Predicated region
      $region17: #{basic_conv_forward.2} parent=5 // pred_check
        %p155 = pneg %p154
      $region18: #{basic_conv_forward.2} parent=5 // pred_check_branch
        %157 = sbr.rel (%p155) target = $region20
      $region19: #{basic_conv_forward.2} parent=5 // pred_region
        // Predicated region
        $region21: #{basic_conv_forward.2} parent=19 // pred_check
          %p158 = pneg %p31
        $region22: #{basic_conv_forward.2} parent=19 // pred_check_branch
          %160 = sbr.rel (%p158) target = $region24
        $region23: #{basic_conv_forward.2} parent=19 // pred_region
          %s161 = sand.u32 %s21, 1
          %s162 = sand.u32 %s21, 1
          %s163 = smul.addr %s162, 40
          %s164 = scalar_lea.vmem [#allocation2], %s163
          %s165 = smul.u32 2, %s11
          %s166 = smul.addr %s165, 4
          %s167 = scalar_lea.vmem %s0, %s166
          // Predicated region
          $region25: #{basic_conv_forward.2} parent=23 // pred_check
            _
          $region26: #{basic_conv_forward.2} parent=23 // pred_check_branch
            %169 = sbr.rel (0) target = $region28
          $region27: #{basic_conv_forward.2} parent=23 // pred_region
            // Predicated region
            $region29: #{basic_conv_forward.2} parent=27 // pred_check
              _
            $region30: #{basic_conv_forward.2} parent=27 // pred_check_branch
              %171 = sbr.rel (0) target = $region32
            $region31: #{basic_conv_forward.2} parent=27 // pred_region
              // Predicated region
              $region44: #{basic_conv_forward.2} parent=31 // pred_check
                _
              $region45: #{basic_conv_forward.2} parent=31 // pred_check_branch
                %194 = sbr.rel (0) target = $region47
              $region46: #{basic_conv_forward.2} parent=31 // pred_region
                loop: start=0, step=1, limit=1
                $region48: #{basic_conv_forward.2} parent=46 // loop_pre_header
                  _
                $region49: #{basic_conv_forward.2} parent=46 // loop_header
                  %s196 = sphi 0, %s200
                  %p197 = scmp.ge.s32.totalorder %s196, 1
                  %s201 = sphi %s167, %s167
                  %s202 = sphi %s164, %s164
                $region50: #{basic_conv_forward.2} parent=46 // loop_header_branch
                  %199 = sbr.rel (%p197) target = $region54
                $region51: #{basic_conv_forward.2} parent=46 // loop_body
                  %v203 = vld [vmem:[%s201] sm:$0xff]
                  %204 = vst [vmem:[%s202] sm:$0xff] %v203
                  %v205 = vld [vmem:[%s201 + $0x10] sm:$0xff]
                  %206 = vst [vmem:[%s202 + $0x8] sm:$0xff] %v205
                  %v207 = vld [vmem:[%s201 + $0x20] sm:$0xff]
                  %208 = vst [vmem:[%s202 + $0x10] sm:$0xff] %v207
                  %v209 = vld [vmem:[%s201 + $0x30] sm:$0xff]
                  %210 = vst [vmem:[%s202 + $0x18] sm:$0xff] %v209
                  %v211 = vld [vmem:[%s201 + $0x40] sm:$0xff]
                  %212 = vst [vmem:[%s202 + $0x20] sm:$0xff] %v211
                $region52: #{basic_conv_forward.2} parent=46 // loop_footer
                  %s200 = sadd.s32 1, %s196
                $region53: #{basic_conv_forward.2} parent=46 // loop_footer_branch
                  %195 = sbr.rel target = $region49
                $region54: #{basic_conv_forward.2} parent=46 // loop_exit
                  _
              $region47: #{basic_conv_forward.2} parent=31 // pred_fallthru
                _
              // Predicated region
              $region55: #{basic_conv_forward.2} parent=31 // pred_check
                _
              $region56: #{basic_conv_forward.2} parent=31 // pred_check_branch
                %214 = sbr.rel target = $region58
              $region57: #{basic_conv_forward.2} parent=31 // pred_region
                _
              $region58: #{basic_conv_forward.2} parent=31 // pred_fallthru
                _
            $region32: #{basic_conv_forward.2} parent=27 // pred_fallthru
              _
            // Predicated region
            $region33: #{basic_conv_forward.2} parent=27 // pred_check
              _
            $region34: #{basic_conv_forward.2} parent=27 // pred_check_branch
              %173 = sbr.rel target = $region36
            $region35: #{basic_conv_forward.2} parent=27 // pred_region
              loop: start=0, step=1, limit=1
              $region37: #{basic_conv_forward.2} parent=35 // loop_pre_header
                _
              $region38: #{basic_conv_forward.2} parent=35 // loop_header
                %s176 = sphi 0, %s180
                %p177 = scmp.ge.s32.totalorder %s176, 1
                %s181 = sphi %s167, %s167
                %s182 = sphi %s164, %s164
              $region39: #{basic_conv_forward.2} parent=35 // loop_header_branch
                %179 = sbr.rel (%p177) target = $region43
              $region40: #{basic_conv_forward.2} parent=35 // loop_body
                %v183 = vld [vmem:[%s181] sm:$0xff]
                %184 = vst [vmem:[%s182] sm:$0xff] %v183
                %v185 = vld [vmem:[%s181 + $0x10] sm:$0xff]
                %186 = vst [vmem:[%s182 + $0x8] sm:$0xff] %v185
                %v187 = vld [vmem:[%s181 + $0x20] sm:$0xff]
                %188 = vst [vmem:[%s182 + $0x10] sm:$0xff] %v187
                %v189 = vld [vmem:[%s181 + $0x30] sm:$0xff]
                %190 = vst [vmem:[%s182 + $0x18] sm:$0xff] %v189
                %v191 = vld [vmem:[%s181 + $0x40] sm:$0xff]
                %192 = vst [vmem:[%s182 + $0x20] sm:$0xff] %v191
              $region41: #{basic_conv_forward.2} parent=35 // loop_footer
                %s180 = sadd.s32 1, %s176
              $region42: #{basic_conv_forward.2} parent=35 // loop_footer_branch
                %175 = sbr.rel target = $region38
              $region43: #{basic_conv_forward.2} parent=35 // loop_exit
                _
            $region36: #{basic_conv_forward.2} parent=27 // pred_fallthru
              _
          $region28: #{basic_conv_forward.2} parent=23 // pred_fallthru
            _
          %215 = vnop
        $region24: #{basic_conv_forward.2} parent=19 // pred_fallthru
          _
      $region20: #{basic_conv_forward.2} parent=5 // pred_fallthru
        _
      %p216 = scmp.le.s32.totalorder 1, %s11
      %p217 = scmp.lt.s32.totalorder %s11, 3
      %p218 = pnand %p216, %p217
      %p219 = pneg %p218
      // Predicated region
      $region59: #{basic_conv_forward.2} parent=5 // pred_check
        _
      $region60: #{basic_conv_forward.2} parent=5 // pred_check_branch
        %221 = sbr.rel (%p218) target = $region62
      $region61: #{basic_conv_forward.2} parent=5 // pred_region
        %s222 = ssub.s32 %s11, 1
        %s223 = sand.u32 %s24, 1
        %s224 = sand.u32 %s24, 1
        %s225 = smul.addr %s224, 40
        %s226 = scalar_lea.vmem [#allocation2], %s225
        // Predicated region
        $region63: #{basic_conv_forward.2} parent=61 // pred_check
          %p227 = pneg %p37
        $region64: #{basic_conv_forward.2} parent=61 // pred_check_branch
          %229 = sbr.rel (%p227) target = $region66
        $region65: #{basic_conv_forward.2} parent=61 // pred_region
          _
        $region66: #{basic_conv_forward.2} parent=61 // pred_fallthru
          _
        %s230 = sand.u32 %s24, 1
        %s231 = sand.u32 %s24, 1
        %s232 = smul.addr %s231, 40
        %s233 = scalar_lea.vmem [#allocation2], %s232
        %p234 = pneg %p37
        %p235 = pneg %p34
        %p236 = pneg %p58
        %p237 = pneg %p55
        %p238 = pneg %p84
        %p239 = pneg %p81
        %s240 = smul.u32 2, %s16
        %p241 = scmp.lt.s32.totalorder %s240, 3
        %s242 = scalar_select %p241, %s240, 3
        %s243 = smul.addr %s242, 4
        %s244 = scalar_lea.vmem %s2, %s243
        %p245 = pneg %p110
        %p246 = pneg %p107
        %p247 = scmp.lt.s32.totalorder %s16, 1
        %s248 = scalar_select %p247, %s16, 1
        %s249 = scalar_lea.vmem %s3, %s248
        %p250 = pneg %p136
        %p251 = pneg %p133
        %p252 = scmp.lt.s32.totalorder %s16, 1
        %s253 = scalar_select %p252, %s16, 1
        %s254 = scalar_lea.vmem %s4, %s253
        %s255 = smul.u32 2, %s16
        %s256 = smul.u32 2, %s16
        %p257 = scmp.lt.s32.totalorder %s256, 3
        %s258 = scalar_select %p257, %s256, 3
        %s259 = smul.addr %s258, 4
        %s260 = scalar_lea.vmem %s2, %s259
        %s261 = smul.u32 2, %s16
        %p262 = scmp.lt.s32.totalorder %s16, 1
        %s263 = scalar_select %p262, %s16, 1
        %s264 = scalar_lea.vmem %s3, %s263
        %p265 = scmp.lt.s32.totalorder %s16, 1
        %s266 = scalar_select %p265, %s16, 1
        %s267 = scalar_lea.vmem %s4, %s266
        %v269 = vld [vmem:[%s1] sm:$0xf]
        %v270 = vld [vmem:[%s226] sm:$0xff]
        %v271 = vld [vmem:[%s226 + $0x8] sm:$0xff]
        %v272 = vld [vmem:[%s226 + $0x10] sm:$0xff]
        %v273 = vld [vmem:[%s226 + $0x18] sm:$0xff]
        %v274 = vld [vmem:[%s226 + $0x20] sm:$0x33]
        %v280 = vunpack.c.l.b16 %v270
        %v281 = vunpack.c.h.b16 %v270
        %v282 = vunpack.c.l.b16 %v271
        %v283 = vunpack.c.h.b16 %v271
        %v284 = vunpack.c.l.b16 %v272
        %v285 = vunpack.c.h.b16 %v272
        %v286 = vunpack.c.l.b16 %v273
        %v287 = vunpack.c.h.b16 %v273
        %v288 = vunpack.c.l.b16 %v274
        %v289 = vunpack.c.h.b16 %v274
        %v290 = vpack.c.b16 %v282, %v280
        %v291 = vpack.c.b16 %v283, %v281
        %v292 = vpack.c.b16 %v286, %v284
        %v293 = vpack.c.b16 %v287, %v285
        %v294 = vpack.c.b16 %v288, %v288
        %v295 = vpack.c.b16 %v289, %v289
        %vm300 = vcmask 293888
        %v302 = vsel %vm300, %v269, 0
        %vm304 = vcmask 1041408
        %v306 = vsel %vm304, %v294, 0
        %v309 = vsel %vm304, %v295, 0
        %311 = vmatprep.subr.bf16.mxu0 %v291
        %312 = vmatpush1.bf16.msra.mxu0 %v290
        %313 = vmatprep.subr.bf16.mxu0 %v293
        %314 = vmatpush1.bf16.msra.mxu0 %v292
        %315 = vmatprep.subr.bf16.mxu0 %v309
        %316 = vmatpush1.bf16.msra.mxu0 %v306
        %317 = vmatprep.subr.bf16.mxu0 0
        %318 = vmatpush1.bf16.msra.mxu0 0
        %319 = vmatprep.subr.bf16.mxu0 0
        %320 = vmatpush1.bf16.msra.mxu0 0
        %321 = vmatprep.subr.bf16.mxu0 0
        %322 = vmatpush1.bf16.msra.mxu0 0
        %323 = vmatprep.subr.bf16.mxu0 0
        %324 = vmatpush1.bf16.msra.mxu0 0
        %325 = vmatprep.subr.bf16.mxu0 0
        %326 = vmatpush1.bf16.msra.mxu0 0
        %327 = vmatprep.subr.bf16.mxu0 0
        %328 = vmatpush1.bf16.msra.mxu0 0
        %329 = vmatprep.subr.bf16.mxu0 0
        %330 = vmatpush1.bf16.msra.mxu0 0
        %331 = vmatprep.subr.bf16.mxu0 0
        %332 = vmatpush1.bf16.msra.mxu0 0
        %333 = vmatprep.subr.bf16.mxu0 0
        %334 = vmatpush1.bf16.msra.mxu0 0
        %335 = vmatprep.subr.bf16.mxu0 0
        %336 = vmatpush1.bf16.msra.mxu0 0
        %337 = vmatprep.subr.bf16.mxu0 0
        %338 = vmatpush1.bf16.msra.mxu0 0
        %339 = vmatprep.subr.bf16.mxu0 0
        %340 = vmatpush1.bf16.msra.mxu0 0
        %341 = vmatprep.subr.bf16.mxu0 0
        %342 = vmatpush1.bf16.msra.mxu0 0
        %343 = vmatprep.mubr.bf16.mxu0 0
        %344 = vmatmul.mubr.bf16.gmra.mrb[0].mxu0 %v302
        %v345 = vpop.f32.mrb[0].mxu0
        %v346 = vadd.f32 0.0, %v345
        %v347 = vpop.f32.mrb[0].mxu0
        %v348 = vadd.f32 0.0, %v347
        %v349 = vpop.f32.mrb[0].mxu0
        %v350 = vpop.f32.mrb[0].mxu0
        %351 = vdwg.mxu0
        %v352 = vpack.c.bf16 %v346, %v346
        %v353 = vpack.c.bf16 %v348, %v348
        %v356 = vunpack.c.l.b16 %v352
        %v357 = vunpack.c.l.b16 %v353
        %v358 = vpack.c.b16 %v357, %v356
        %360 = vst [vmem:[%s260] sm:$0xff] %v358
        %v361 = vadd.f32 %v346, %v348
        %362 = vadd.xlane.f32.xlu0 %v361
        %v363 = vpop.xlane.xlu0 %362
        %v365 = vlaneseq
        %v366 = vand.u32 %v365, 127
        %v367 = vlaneseq
        %v368 = vshrl.u32 %v367, 7
        %v369 = vsub.s32 %v366, %v368
        %v370 = vrot.slane %v363, %v369
        %vm372 = vcmask 57344
        %373 = vst.msk [vmem:[%s264] sm:$0x1] %vm372, %v370
        %v374 = vmul.f32 %v346, %v346
        %v375 = vmul.f32 %v348, %v348
        %v376 = vadd.f32 %v374, %v375
        %377 = vadd.xlane.f32.xlu0 %v376
        %v378 = vpop.xlane.xlu0 %377
        %v380 = vlaneseq
        %v381 = vshrl.u32 %v380, 7
        %v382 = vsub.s32 %v366, %v381
        %v383 = vrot.slane %v378, %v382
        %385 = vst.msk [vmem:[%s267] sm:$0x1] %vm372, %v383
        %s386 = smul.u32 2, %s16
        %p387 = scmp.lt.s32.totalorder %s386, 3
        %s388 = scalar_select %p387, %s386, 3
        %s389 = smul.addr %s388, 4
        %s390 = scalar_lea.vmem %s2, %s389
        %p391 = scmp.lt.s32.totalorder %s16, 1
        %s392 = scalar_select %p391, %s16, 1
        %s393 = scalar_lea.vmem %s3, %s392
        %p394 = scmp.lt.s32.totalorder %s16, 1
        %s395 = scalar_select %p394, %s16, 1
        %s396 = scalar_lea.vmem %s4, %s395
        // Predicated region
        $region67: #{basic_conv_forward.2} parent=61 // pred_check
          %p397 = pneg %p81
        $region68: #{basic_conv_forward.2} parent=61 // pred_check_branch
          %399 = sbr.rel (%p397) target = $region70
        $region69: #{basic_conv_forward.2} parent=61 // pred_region
          %s400 = smul.u32 2, %s16
        $region70: #{basic_conv_forward.2} parent=61 // pred_fallthru
          _
        // Predicated region
        $region71: #{basic_conv_forward.2} parent=61 // pred_check
          %p401 = pneg %p107
        $region72: #{basic_conv_forward.2} parent=61 // pred_check_branch
          %403 = sbr.rel (%p401) target = $region74
        $region73: #{basic_conv_forward.2} parent=61 // pred_region
          _
        $region74: #{basic_conv_forward.2} parent=61 // pred_fallthru
          _
        // Predicated region
        $region75: #{basic_conv_forward.2} parent=61 // pred_check
          %p404 = pneg %p133
        $region76: #{basic_conv_forward.2} parent=61 // pred_check_branch
          %406 = sbr.rel (%p404) target = $region78
        $region77: #{basic_conv_forward.2} parent=61 // pred_region
          _
        $region78: #{basic_conv_forward.2} parent=61 // pred_fallthru
          _
      $region62: #{basic_conv_forward.2} parent=5 // pred_fallthru
        _
      %p407 = scmp.le.s32.totalorder 2, %s11
      // Predicated region
      $region79: #{basic_conv_forward.2} parent=5 // pred_check
        %p408 = pneg %p407
      $region80: #{basic_conv_forward.2} parent=5 // pred_check_branch
        %410 = sbr.rel (%p408) target = $region82
      $region81: #{basic_conv_forward.2} parent=5 // pred_region
        %s411 = ssub.s32 %s11, 2
        // Predicated region
        $region83: #{basic_conv_forward.2} parent=81 // pred_check
          %p412 = pneg %p87
        $region84: #{basic_conv_forward.2} parent=81 // pred_check_branch
          %414 = sbr.rel (%p412) target = $region86
        $region85: #{basic_conv_forward.2} parent=81 // pred_region
          %s415 = smul.u32 2, %s17
          %p416 = scmp.lt.s32.totalorder %s415, 3
          %s417 = scalar_select %p416, %s415, 3
          %s418 = smul.addr %s417, 4
          %s419 = scalar_lea.vmem %s2, %s418
        $region86: #{basic_conv_forward.2} parent=81 // pred_fallthru
          _
        // Predicated region
        $region87: #{basic_conv_forward.2} parent=81 // pred_check
          %p420 = pneg %p113
        $region88: #{basic_conv_forward.2} parent=81 // pred_check_branch
          %422 = sbr.rel (%p420) target = $region90
        $region89: #{basic_conv_forward.2} parent=81 // pred_region
          %p423 = scmp.lt.s32.totalorder %s17, 1
          %s424 = scalar_select %p423, %s17, 1
          %s425 = scalar_lea.vmem %s3, %s424
        $region90: #{basic_conv_forward.2} parent=81 // pred_fallthru
          _
        // Predicated region
        $region91: #{basic_conv_forward.2} parent=81 // pred_check
          %p426 = pneg %p139
        $region92: #{basic_conv_forward.2} parent=81 // pred_check_branch
          %428 = sbr.rel (%p426) target = $region94
        $region93: #{basic_conv_forward.2} parent=81 // pred_region
          %p429 = scmp.lt.s32.totalorder %s17, 1
          %s430 = scalar_select %p429, %s17, 1
          %s431 = scalar_lea.vmem %s4, %s430
        $region94: #{basic_conv_forward.2} parent=81 // pred_fallthru
          _
      $region82: #{basic_conv_forward.2} parent=5 // pred_fallthru
        _
    $region6: #{basic_conv_forward.2} parent=1 // loop_footer
      %s15 = sadd.s32 1, %s11
    $region7: #{basic_conv_forward.2} parent=1 // loop_footer_branch
      %10 = sbr.rel target = $region3
    $region8: #{basic_conv_forward.2} parent=1 // loop_exit
      _

// kernel: basic_conv_forward.3
$region0: #{basic_conv_forward.3}
  #allocation0 [shape = 'u32[]', space=smem, size = 0x4, offset = 0x4, fixed_abs, tag = 'smem constant byte address 0x4 - core index']
  #allocation1 [shape = 'u32[144,128]{1,0:T(1,128)}', space=vmem, size = 0x12000, scoped, tag = 'internal scratch']
  %s0 = inlined_call_operand.vmem [shape: bf16[8,512], index: 0, kind: input, shape index: {}]
  %s1 = inlined_call_operand.vmem [shape: f32[8,1], index: 1, kind: input, shape index: {}]
  %s2 = inlined_call_operand.vmem [shape: f32[8,1], index: 2, kind: input, shape index: {}]
  %s3 = inlined_call_operand.vmem [shape: f32[2,8,256], index: 3, kind: output, shape index: {}]
  %s4 = sld [smem:[#allocation0]]
  $region45: #{basic_conv_forward.3} parent=0
    _
  %s6 = ssub.s32 1, %s4
  %s7 = scalar_select 0, %s6, %s4
  loop: start=0, step=1, limit=6
  $region2: #{basic_conv_forward.3} parent=0 // loop_pre_header
    _
  $region3: #{basic_conv_forward.3} parent=0 // loop_header
    %s9 = sphi 0, %s13
    %p10 = scmp.ge.s32.totalorder %s9, 6
    %s16 = sphi 0, %s28
    %s17 = sphi 0, %s24
    %s18 = sphi 0, %s16
    %s19 = sphi 0, %s17
    %s20 = sphi 0, %s18
    %s21 = sphi 0, %s19
    %s35 = sphi 0, %s37
    %s38 = sphi 0, %s35
    %s39 = sphi 0, %s38
    %s55 = sphi 0, %s39
    %s59 = sphi 0, %s59
    %s61 = sphi 0, %s59
    %s62 = sphi 0, %s61
    %s76 = sphi 0, %s62
    %s80 = sphi 0, %s80
    %s82 = sphi 0, %s80
    %s83 = sphi 0, %s82
    %s97 = sphi 0, %s83
    %s105 = sphi 0, %s107
    %s108 = sphi 0, %s105
    %s109 = sphi 0, %s108
    %s125 = sphi 0, %s109
  $region4: #{basic_conv_forward.3} parent=0 // loop_header_branch
    %12 = sbr.rel (%p10) target = $region8
  $region5: #{basic_conv_forward.3} parent=0 // loop_body
    %s14 = ssub.s32 %s9, 1
    %s15 = ssub.s32 %s9, 2
    %s22 = sadd.s32 1, %s17
    %p23 = scmp.ge.s32.totalorder %s22, 2
    %s24 = scalar_select %p23, 0, %s22
    %s25 = sadd.s32 1, %s16
    %s26 = scalar_select %p23, %s25, %s16
    %p27 = scmp.ge.s32.totalorder %s26, 2
    %s28 = scalar_select %p27, 0, %s26
    %s29 = smul.u32 %s16, 2
    %s30 = sadd.s32 %s29, %s17
    %s31 = smul.u32 %s28, 2
    %s32 = sadd.s32 %s31, %s24
    %s33 = ssub.s32 %s30, %s32
    %p34 = scmp.eq.s32.totalorder %s33, 0
    %s36 = sadd.s32 %s35, 1
    %s37 = scalar_select %p34, %s35, %s36
    %p40 = pneg %p34
    %p41 = scmp.eq.s32.totalorder %s9, 3
    %p42 = por %p40, %p41
    %p43 = scmp.ne.s32.totalorder %s35, %s38
    %p44 = scmp.eq.s32.totalorder %s9, 0
    %p45 = por %p43, %p44
    %p46 = scmp.ne.s32.totalorder %s35, %s38
    %p47 = scmp.eq.s32.totalorder %s14, 3
    %p48 = por %p46, %p47
    %p49 = scmp.ne.s32.totalorder %s38, %s39
    %p50 = scmp.eq.s32.totalorder %s14, 0
    %p51 = por %p49, %p50
    %p52 = scmp.ne.s32.totalorder %s38, %s39
    %p53 = scmp.eq.s32.totalorder %s15, 3
    %p54 = por %p52, %p53
    %p56 = scmp.ne.s32.totalorder %s39, %s55
    %p57 = scmp.eq.s32.totalorder %s15, 0
    %p58 = por %p56, %p57
    %s60 = sadd.s32 %s59, 1
    %p63 = scmp.eq.s32.totalorder %s9, 3
    %p64 = scmp.ne.s32.totalorder %s59, %s61
    %p65 = scmp.eq.s32.totalorder %s9, 0
    %p66 = por %p64, %p65
    %p67 = scmp.ne.s32.totalorder %s59, %s61
    %p68 = scmp.eq.s32.totalorder %s14, 3
    %p69 = por %p67, %p68
    %p70 = scmp.ne.s32.totalorder %s61, %s62
    %p71 = scmp.eq.s32.totalorder %s14, 0
    %p72 = por %p70, %p71
    %p73 = scmp.ne.s32.totalorder %s61, %s62
    %p74 = scmp.eq.s32.totalorder %s15, 3
    %p75 = por %p73, %p74
    %p77 = scmp.ne.s32.totalorder %s62, %s76
    %p78 = scmp.eq.s32.totalorder %s15, 0
    %p79 = por %p77, %p78
    %s81 = sadd.s32 %s80, 1
    %p84 = scmp.eq.s32.totalorder %s9, 3
    %p85 = scmp.ne.s32.totalorder %s80, %s82
    %p86 = scmp.eq.s32.totalorder %s9, 0
    %p87 = por %p85, %p86
    %p88 = scmp.ne.s32.totalorder %s80, %s82
    %p89 = scmp.eq.s32.totalorder %s14, 3
    %p90 = por %p88, %p89
    %p91 = scmp.ne.s32.totalorder %s82, %s83
    %p92 = scmp.eq.s32.totalorder %s14, 0
    %p93 = por %p91, %p92
    %p94 = scmp.ne.s32.totalorder %s82, %s83
    %p95 = scmp.eq.s32.totalorder %s15, 3
    %p96 = por %p94, %p95
    %p98 = scmp.ne.s32.totalorder %s83, %s97
    %p99 = scmp.eq.s32.totalorder %s15, 0
    %p100 = por %p98, %p99
    %s101 = ssub.s32 %s16, %s28
    %s102 = ssub.s32 %s17, %s24
    %s103 = sor.u32 %s101, %s102
    %p104 = scmp.eq.s32.totalorder %s103, 0
    %s106 = sadd.s32 %s105, 1
    %s107 = scalar_select %p104, %s105, %s106
    %p110 = pneg %p104
    %p111 = scmp.eq.s32.totalorder %s9, 3
    %p112 = por %p110, %p111
    %p113 = scmp.ne.s32.totalorder %s105, %s108
    %p114 = scmp.eq.s32.totalorder %s9, 0
    %p115 = por %p113, %p114
    %p116 = scmp.ne.s32.totalorder %s105, %s108
    %p117 = scmp.eq.s32.totalorder %s14, 3
    %p118 = por %p116, %p117
    %p119 = scmp.ne.s32.totalorder %s108, %s109
    %p120 = scmp.eq.s32.totalorder %s14, 0
    %p121 = por %p119, %p120
    %p122 = scmp.ne.s32.totalorder %s108, %s109
    %p123 = scmp.eq.s32.totalorder %s15, 3
    %p124 = por %p122, %p123
    %p126 = scmp.ne.s32.totalorder %s109, %s125
    %p127 = scmp.eq.s32.totalorder %s15, 0
    %p128 = por %p126, %p127
    %p129 = scmp.le.s32.totalorder 1, %s9
    %p130 = scmp.lt.s32.totalorder %s9, 5
    %p131 = pnand %p129, %p130
    %p132 = pneg %p131
    // Predicated region
    $region9: #{basic_conv_forward.3} parent=5 // pred_check
      _
    $region10: #{basic_conv_forward.3} parent=5 // pred_check_branch
      %134 = sbr.rel (%p131) target = $region12
    $region11: #{basic_conv_forward.3} parent=5 // pred_region
      %s135 = ssub.s32 %s9, 1
      // Predicated region
      $region13: #{basic_conv_forward.3} parent=11 // pred_check
        %p136 = pneg %p72
      $region14: #{basic_conv_forward.3} parent=11 // pred_check_branch
        %138 = sbr.rel (%p136) target = $region16
      $region15: #{basic_conv_forward.3} parent=11 // pred_region
        _
      $region16: #{basic_conv_forward.3} parent=11 // pred_fallthru
        _
      // Predicated region
      $region17: #{basic_conv_forward.3} parent=11 // pred_check
        %p139 = pneg %p93
      $region18: #{basic_conv_forward.3} parent=11 // pred_check_branch
        %141 = sbr.rel (%p139) target = $region20
      $region19: #{basic_conv_forward.3} parent=11 // pred_region
        _
      $region20: #{basic_conv_forward.3} parent=11 // pred_fallthru
        _
    $region12: #{basic_conv_forward.3} parent=5 // pred_fallthru
      _
    %p142 = scmp.lt.s32.totalorder %s9, 4
    // Predicated region
    $region21: #{basic_conv_forward.3} parent=5 // pred_check
      %p143 = pneg %p142
    $region22: #{basic_conv_forward.3} parent=5 // pred_check_branch
      %145 = sbr.rel (%p143) target = $region24
    $region23: #{basic_conv_forward.3} parent=5 // pred_region
      // Predicated region
      $region25: #{basic_conv_forward.3} parent=23 // pred_check
        %p146 = pneg %p45
      $region26: #{basic_conv_forward.3} parent=23 // pred_check_branch
        %148 = sbr.rel (%p146) target = $region28
      $region27: #{basic_conv_forward.3} parent=23 // pred_region
        %s149 = smul.u32 %s16, 2
        %s150 = sadd.s32 %s149, %s17
        %p151 = scmp.lt.s32.totalorder %s150, 3
        %s152 = scalar_select %p151, %s150, 3
        %s153 = smul.addr %s152, 4
        %s154 = scalar_lea.vmem %s0, %s153
        %s155 = smul.u32 %s16, 2
        %s156 = sadd.s32 %s155, %s17
      $region28: #{basic_conv_forward.3} parent=23 // pred_fallthru
        _
    $region24: #{basic_conv_forward.3} parent=5 // pred_fallthru
      _
    %p157 = scmp.le.s32.totalorder 1, %s9
    %p158 = scmp.lt.s32.totalorder %s9, 5
    %p159 = pnand %p157, %p158
    %p160 = pneg %p159
    // Predicated region
    $region29: #{basic_conv_forward.3} parent=5 // pred_check
      _
    $region30: #{basic_conv_forward.3} parent=5 // pred_check_branch
      %162 = sbr.rel (%p159) target = $region32
    $region31: #{basic_conv_forward.3} parent=5 // pred_region
      %s163 = ssub.s32 %s9, 1
      %s164 = smul.u32 %s18, 2
      %s165 = sadd.s32 %s164, %s19
      %p166 = scmp.lt.s32.totalorder %s165, 3
      %s167 = scalar_select %p166, %s165, 3
      %s168 = smul.addr %s167, 4
      %s169 = scalar_lea.vmem %s0, %s168
      %p170 = pneg %p51
      %p171 = pneg %p48
      %p172 = pneg %p72
      %p173 = pneg %p69
      %p174 = pneg %p93
      %p175 = pneg %p90
      %p176 = pneg %p121
      %p177 = pneg %p118
      %p178 = scmp.lt.s32.totalorder %s18, 1
      %s179 = scalar_select %p178, %s18, 1
      %p180 = scmp.lt.s32.totalorder %s19, 1
      %s181 = scalar_select %p180, %s19, 1
      %s182 = smul.addr %s179, 2
      %s183 = sadd.s32 %s181, %s182
      %s184 = smul.addr %s183, 8
      %s185 = scalar_lea.vmem %s3, %s184
      %s186 = smul.u32 %s18, 2
      %s187 = sadd.s32 %s186, %s19
      %p188 = scmp.lt.s32.totalorder %s187, 3
      %s189 = scalar_select %p188, %s187, 3
      %s190 = smul.addr %s189, 4
      %s191 = scalar_lea.vmem %s0, %s190
      %s192 = smul.u32 %s18, 2
      %s193 = sadd.s32 %s192, %s19
      %p194 = scmp.lt.s32.totalorder %s18, 1
      %s195 = scalar_select %p194, %s18, 1
      %p196 = scmp.lt.s32.totalorder %s19, 1
      %s197 = scalar_select %p196, %s19, 1
      %s198 = smul.addr %s195, 2
      %s199 = sadd.s32 %s197, %s198
      %s200 = smul.addr %s199, 8
      %s201 = scalar_lea.vmem %s3, %s200
      %v202 = vld [vmem:[%s191] sm:$0xf]
      %v203 = vunpack.c.l.bf16 %v202
      %v204 = vld [vmem:[%s1] sm:$0xff]
      %206 = vset.pattern.permute.xlu0 0
      %207 = vperm.xlu0 %206, %v204
      %v208 = vpop.permute.xlu0 %207
      %v210 = vmul.f32 %v203, %v208
      %v211 = vld [vmem:[%s2] sm:$0xff]
      %213 = vset.pattern.permute.xlu0 0
      %214 = vperm.xlu0 %213, %v211
      %v215 = vpop.permute.xlu0 %214
      %v217 = vadd.f32 %v210, %v215
      %v218 = vmax.f32 %v217, 0.0
      %219 = vst [vmem:[%s201] sm:$0xff] %v218
      %p220 = scmp.lt.s32.totalorder %s18, 1
      %s221 = scalar_select %p220, %s18, 1
      %p222 = scmp.lt.s32.totalorder %s19, 1
      %s223 = scalar_select %p222, %s19, 1
      %s224 = smul.addr %s221, 2
      %s225 = sadd.s32 %s223, %s224
      %s226 = smul.addr %s225, 8
      %s227 = scalar_lea.vmem %s3, %s226
      // Predicated region
      $region33: #{basic_conv_forward.3} parent=31 // pred_check
        %p228 = pneg %p118
      $region34: #{basic_conv_forward.3} parent=31 // pred_check_branch
        %230 = sbr.rel (%p228) target = $region36
      $region35: #{basic_conv_forward.3} parent=31 // pred_region
        _
      $region36: #{basic_conv_forward.3} parent=31 // pred_fallthru
        _
    $region32: #{basic_conv_forward.3} parent=5 // pred_fallthru
      _
    %p231 = scmp.le.s32.totalorder 2, %s9
    // Predicated region
    $region37: #{basic_conv_forward.3} parent=5 // pred_check
      %p232 = pneg %p231
    $region38: #{basic_conv_forward.3} parent=5 // pred_check_branch
      %234 = sbr.rel (%p232) target = $region40
    $region39: #{basic_conv_forward.3} parent=5 // pred_region
      %s235 = ssub.s32 %s9, 2
      // Predicated region
      $region41: #{basic_conv_forward.3} parent=39 // pred_check
        %p236 = pneg %p124
      $region42: #{basic_conv_forward.3} parent=39 // pred_check_branch
        %238 = sbr.rel (%p236) target = $region44
      $region43: #{basic_conv_forward.3} parent=39 // pred_region
        %p239 = scmp.lt.s32.totalorder %s20, 1
        %s240 = scalar_select %p239, %s20, 1
        %p241 = scmp.lt.s32.totalorder %s21, 1
        %s242 = scalar_select %p241, %s21, 1
        %s243 = smul.addr %s240, 2
        %s244 = sadd.s32 %s242, %s243
        %s245 = smul.addr %s244, 8
        %s246 = scalar_lea.vmem %s3, %s245
      $region44: #{basic_conv_forward.3} parent=39 // pred_fallthru
        _
    $region40: #{basic_conv_forward.3} parent=5 // pred_fallthru
      _
  $region6: #{basic_conv_forward.3} parent=0 // loop_footer
    %s13 = sadd.s32 1, %s9
  $region7: #{basic_conv_forward.3} parent=0 // loop_footer_branch
    %8 = sbr.rel target = $region3
  $region8: #{basic_conv_forward.3} parent=0 // loop_exit
    _

</llo_original>
